<compile_context>
chip_gen: v6e
topology: v6e:2x2x1
jax: 0.10.0
libtpu: 0.0.40
codegen_flags: <defaults>
</compile_context>

<pallas_src>
import functools

import jax
import jax.numpy as jnp
import numpy as np
from jax.experimental import pallas as pl
from jax.experimental.pallas import tpu as pltpu


def _pick_tile(n, target):
    """Largest tile <= target that divides n; keeps sublane block dims a multiple
    of 8 (or falls back to the full extent, which is always legal)."""
    if n <= target:
        return n
    for t in range(target, 0, -8):
        if t % 8 == 0 and n % t == 0:
            return t
    return n


def _qkv_proj_kernel(x_ref, wq_ref, wk_ref, wv_ref, bq_ref, bk_ref, bv_ref,
                     q_ref, k_ref, v_ref, *, n_heads):
    """One grid step: a row tile of one sample -> head-major Q, K, V tiles.

    Weights are pre-transposed (in_dim, out_dim): no in-kernel `.T`.
    The softmax scale is already folded into wq/bq on the host.
    """
    x = x_ref[0]                                   # (tn, D)
    tn, d = x.shape
    hd = d // n_heads

    def proj(w_ref, b_ref, o_ref):
        y = jnp.dot(x, w_ref[...], preferred_element_type=jnp.float32)
        y = y + b_ref[...]                         # (tn, D)
        y = y.reshape(tn, n_heads, hd)
        # head-major so the attention kernel runs pure batched matmuls
        o_ref[0] = jnp.transpose(y, (1, 0, 2)).astype(o_ref.dtype)

    proj(wq_ref, bq_ref, q_ref)
    proj(wk_ref, bk_ref, k_ref)
    proj(wv_ref, bv_ref, v_ref)


def _flash_attn_proj_kernel(q_ref, k_ref, v_ref, wp_ref, bp_ref, o_ref,
                            m_sc, l_sc, acc_sc):
    """Flash-style attention over the kv grid axis + fused output projection."""
    ki = pl.program_id(2)

    @pl.when(ki == 0)
    def _():
        m_sc[...] = jnp.full(m_sc.shape, -jnp.inf, dtype=m_sc.dtype)
        l_sc[...] = jnp.zeros(l_sc.shape, dtype=l_sc.dtype)
        acc_sc[...] = jnp.zeros(acc_sc.shape, dtype=acc_sc.dtype)

    q = q_ref[0]                                   # (H, tq, hd), scale pre-folded
    k = k_ref[0]                                   # (H, tk, hd)
    v = v_ref[0]                                   # (H, tk, hd)

    # Head-major batched matmul (batch dim leading, contraction over hd).
    s = jnp.einsum('hqd,hkd->hqk', q, k,
                   preferred_element_type=jnp.float32)          # (H, tq, tk)

    m_prev = m_sc[...]
    m_new = jnp.maximum(m_prev, jnp.max(s, axis=-1, keepdims=True))
    alpha = jnp.exp(m_prev - m_new)
    p = jnp.exp(s - m_new)                                       # f32 softmax math
    l_sc[...] = alpha * l_sc[...] + jnp.sum(p, axis=-1, keepdims=True)
    acc_sc[...] = alpha * acc_sc[...] + jnp.einsum(
        'hqk,hkd->hqd', p.astype(v.dtype), v,
        preferred_element_type=jnp.float32)                      # (H, tq, hd)
    m_sc[...] = m_new

    @pl.when(ki == pl.num_programs(2) - 1)
    def _():
        inv_l = pl.reciprocal(l_sc[...], approx=True)            # EUP, not VALU divide
        weighted = acc_sc[...] * inv_l                           # (H, tq, hd)
        h, tq, hd = weighted.shape
        weighted = jnp.transpose(weighted, (1, 0, 2)).reshape(tq, h * hd)
        out = jnp.dot(weighted.astype(wp_ref.dtype), wp_ref[...],
                      preferred_element_type=jnp.float32) + bp_ref[...]
        o_ref[0] = out.astype(o_ref.dtype)                       # lane-dense (tq, D)


def attention_pallas(x, w_qkv, b_qkv, w_proj, b_proj, *, n_heads,
                     q_tile=128, kv_tile=128, proj_tile=256):
    """x: (B, N, D); w_qkv: (3D, D); b_qkv: (3D,); w_proj: (D, D); b_proj: (D,).
    Weights follow nn.Linear convention (out_features, in_features)."""
    batch, n_tokens, dim = x.shape
    assert dim % n_heads == 0
    head_dim = dim // n_heads
    scale = head_dim ** (-0.5)
    dtype = x.dtype

    # --- one-time host-side prep: transpose, split, fold softmax scale into q ---
    wq_t = (w_qkv[0 * dim:1 * dim].T * scale).astype(dtype)      # (D, D)
    wk_t = w_qkv[1 * dim:2 * dim].T.astype(dtype)
    wv_t = w_qkv[2 * dim:3 * dim].T.astype(dtype)
    bq = (b_qkv[0 * dim:1 * dim] * scale).reshape(1, dim).astype(dtype)
    bk = b_qkv[1 * dim:2 * dim].reshape(1, dim).astype(dtype)
    bv = b_qkv[2 * dim:3 * dim].reshape(1, dim).astype(dtype)
    wp_t = w_proj.T.astype(dtype)                                # (D, D)
    bp = b_proj.reshape(1, dim).astype(dtype)

    tn = _pick_tile(n_tokens, proj_tile)
    tq = _pick_tile(n_tokens, q_tile)
    tk = _pick_tile(n_tokens, kv_tile)

    # ---------------- Kernel A: fused QKV projection -> head-major -------------
    qkv_out_shape = tuple(
        jax.ShapeDtypeStruct((batch, n_heads, n_tokens, head_dim), dtype)
        for _ in range(3))
    q_hm, k_hm, v_hm = pl.pallas_call(
        functools.partial(_qkv_proj_kernel, n_heads=n_heads),
        out_shape=qkv_out_shape,
        grid_spec=pltpu.PrefetchScalarGridSpec(
            num_scalar_prefetch=0,
            grid=(batch, n_tokens // tn),
            in_specs=[
                pl.BlockSpec((1, tn, dim), lambda b, i: (b, i, 0)),   # x rows
                pl.BlockSpec((dim, dim), lambda b, i: (0, 0)),        # Wq^T (scaled)
                pl.BlockSpec((dim, dim), lambda b, i: (0, 0)),        # Wk^T
                pl.BlockSpec((dim, dim), lambda b, i: (0, 0)),        # Wv^T
                pl.BlockSpec((1, dim), lambda b, i: (0, 0)),          # bq (scaled)
                pl.BlockSpec((1, dim), lambda b, i: (0, 0)),          # bk
                pl.BlockSpec((1, dim), lambda b, i: (0, 0)),          # bv
            ],
            out_specs=[
                pl.BlockSpec((1, n_heads, tn, head_dim), lambda b, i: (b, 0, i, 0))
                for _ in range(3)
            ],
        ),
        compiler_params=pltpu.CompilerParams(
            dimension_semantics=("parallel", "parallel"),
            vmem_limit_bytes=48 * 1024 * 1024),
    )(x, wq_t, wk_t, wv_t, bq, bk, bv)

    # -------- Kernel B: flash attention (online softmax) + output projection ----
    out = pl.pallas_call(
        _flash_attn_proj_kernel,
        out_shape=jax.ShapeDtypeStruct((batch, n_tokens, dim), dtype),
        grid_spec=pltpu.PrefetchScalarGridSpec(
            num_scalar_prefetch=0,
            grid=(batch, n_tokens // tq, n_tokens // tk),
            in_specs=[
                pl.BlockSpec((1, n_heads, tq, head_dim),
                             lambda b, qi, ki: (b, 0, qi, 0)),        # Q tile
                pl.BlockSpec((1, n_heads, tk, head_dim),
                             lambda b, qi, ki: (b, 0, ki, 0)),        # K tile
                pl.BlockSpec((1, n_heads, tk, head_dim),
                             lambda b, qi, ki: (b, 0, ki, 0)),        # V tile
                pl.BlockSpec((dim, dim), lambda b, qi, ki: (0, 0)),   # Wproj^T (resident)
                pl.BlockSpec((1, dim), lambda b, qi, ki: (0, 0)),     # bproj
            ],
            out_specs=pl.BlockSpec((1, tq, dim), lambda b, qi, ki: (b, qi, 0)),
            scratch_shapes=[
                pltpu.VMEM((n_heads, tq, 1), jnp.float32),            # running max
                pltpu.VMEM((n_heads, tq, 1), jnp.float32),            # running sum
                pltpu.VMEM((n_heads, tq, head_dim), jnp.float32),     # acc
            ],
        ),
        compiler_params=pltpu.CompilerParams(
            dimension_semantics=("parallel", "parallel", "arbitrary"),
            vmem_limit_bytes=48 * 1024 * 1024),
    )(q_hm, k_hm, v_hm, wp_t, bp)
    return out


def attention_reference(x, w_qkv, b_qkv, w_proj, b_proj, *, n_heads):
    """Pure-JAX reference mirroring the PyTorch forward exactly."""
    batch, n_tokens, dim = x.shape
    head_dim = dim // n_heads
    scale = head_dim ** (-0.5)

    qkv = jnp.einsum('bnd,od->bno', x, w_qkv) + b_qkv                  # (B, N, 3D)
    qkv = qkv.reshape(batch, n_tokens, 3, n_heads, head_dim)
    qkv = jnp.transpose(qkv, (2, 0, 3, 1, 4))                          # (3, B, H, N, hd)
    q, k, v = qkv[0], qkv[1], qkv[2]
    dp = jnp.einsum('bhnd,bhmd->bhnm', q, k) * scale
    attn = jax.nn.softmax(dp, axis=-1)
    weighted = jnp.einsum('bhnm,bhmd->bhnd', attn, v)
    weighted = jnp.transpose(weighted, (0, 2, 1, 3)).reshape(batch, n_tokens, dim)
    out = jnp.einsum('bnd,od->bno', weighted, w_proj) + b_proj
    return out


if __name__ == "__main__":
    batch, n_tokens, dim, n_heads = 2, 8, 32, 4

    key = jax.random.PRNGKey(0)
    kx, kwq, kbq, kwp, kbp = jax.random.split(key, 5)

    x = jax.random.normal(kx, (batch, n_tokens, dim), dtype=jnp.float32)
    # nn.Linear-style parameter shapes, deterministic init.
    w_qkv = jax.random.normal(kwq, (3 * dim, dim), dtype=jnp.float32) * 0.05
    b_qkv = jax.random.normal(kbq, (3 * dim,), dtype=jnp.float32) * 0.05
    w_proj = jax.random.normal(kwp, (dim, dim), dtype=jnp.float32) * 0.05
    b_proj = jax.random.normal(kbp, (dim,), dtype=jnp.float32) * 0.05

    out = attention_pallas(x, w_qkv, b_qkv, w_proj, b_proj, n_heads=n_heads)
    out = jax.block_until_ready(out)

    ref = attention_reference(x, w_qkv, b_qkv, w_proj, b_proj, n_heads=n_heads)
    # Tolerance relaxed vs pure-f32 because the softmax normalization uses the
    # EUP approximate reciprocal (pl.reciprocal(..., approx=True)).
    np.testing.assert_allclose(np.asarray(out), np.asarray(ref),
                               rtol=1e-2, atol=1e-2)

    print("KERNEL_OK")
</pallas_src>

<mosaic_0001>
module attributes {stable_mosaic.version = 11 : i64} {
  func.func @_qkv_proj_kernel(%arg0: i32, %arg1: i32, %arg2: memref<1x8x32xf32, #tpu.memory_space<vmem>>, %arg3: memref<32x32xf32, #tpu.memory_space<vmem>>, %arg4: memref<32x32xf32, #tpu.memory_space<vmem>>, %arg5: memref<32x32xf32, #tpu.memory_space<vmem>>, %arg6: memref<1x32xf32, #tpu.memory_space<vmem>>, %arg7: memref<1x32xf32, #tpu.memory_space<vmem>>, %arg8: memref<1x32xf32, #tpu.memory_space<vmem>>, %arg9: memref<1x4x8x8xf32, #tpu.memory_space<vmem>>, %arg10: memref<1x4x8x8xf32, #tpu.memory_space<vmem>>, %arg11: memref<1x4x8x8xf32, #tpu.memory_space<vmem>>) attributes {dimension_semantics = [#tpu.dimension_semantics<parallel>, #tpu.dimension_semantics<parallel>], iteration_bounds = array<i64: 2, 1>, scalar_prefetch = 0 : i64, scratch_operands = 0 : i64, tpu.core_type = #tpu.core_type<tc>, window_params = [{transform_indices = @transform_0, window_bounds = array<i64: 1, 8, 32>}, {pipeline_mode = #tpu.pipeline_mode<synchronous>, transform_indices = @transform_1, window_bounds = array<i64: 32, 32>}, {pipeline_mode = #tpu.pipeline_mode<synchronous>, transform_indices = @transform_2, window_bounds = array<i64: 32, 32>}, {pipeline_mode = #tpu.pipeline_mode<synchronous>, transform_indices = @transform_3, window_bounds = array<i64: 32, 32>}, {pipeline_mode = #tpu.pipeline_mode<synchronous>, transform_indices = @transform_4, window_bounds = array<i64: 1, 32>}, {pipeline_mode = #tpu.pipeline_mode<synchronous>, transform_indices = @transform_5, window_bounds = array<i64: 1, 32>}, {pipeline_mode = #tpu.pipeline_mode<synchronous>, transform_indices = @transform_6, window_bounds = array<i64: 1, 32>}, {transform_indices = @transform_7, window_bounds = array<i64: 1, 4, 8, 8>}, {transform_indices = @transform_8, window_bounds = array<i64: 1, 4, 8, 8>}, {transform_indices = @transform_9, window_bounds = array<i64: 1, 4, 8, 8>}]} {
    %c0 = arith.constant 0 : index
    %c0_0 = arith.constant 0 : index
    %c0_1 = arith.constant 0 : index
    %0 = vector.load %arg2[%c0, %c0_0, %c0_1] : memref<1x8x32xf32, #tpu.memory_space<vmem>>, vector<1x8x32xf32>
    %1 = vector.shape_cast %0 : vector<1x8x32xf32> to vector<8x32xf32>
    %c0_2 = arith.constant 0 : index
    %c0_3 = arith.constant 0 : index
    %2 = vector.load %arg3[%c0_2, %c0_3] : memref<32x32xf32, #tpu.memory_space<vmem>>, vector<32x32xf32>
    %cst = arith.constant dense<0.000000e+00> : vector<8x32xf32>
    %3 = tpu.matmul %1, %2, %cst {dimension_numbers = #tpu.dot_dimension_numbers<[1], [0], [0], [1], [0, 0, 1, 1], [], []>} : vector<8x32xf32>, vector<32x32xf32>, vector<8x32xf32> -> vector<8x32xf32>
    %c0_4 = arith.constant 0 : index
    %c0_5 = arith.constant 0 : index
    %4 = vector.load %arg6[%c0_4, %c0_5] : memref<1x32xf32, #tpu.memory_space<vmem>>, vector<1x32xf32>
    %5 = vector.broadcast %4 : vector<1x32xf32> to vector<8x32xf32>
    %6 = arith.addf %3, %5 : vector<8x32xf32>
    %7 = vector.shape_cast %6 : vector<8x32xf32> to vector<8x4x8xf32>
    %8 = tpu.transpose %7, [1, 0, 2] : vector<8x4x8xf32> -> vector<4x8x8xf32>
    %c0_6 = arith.constant 0 : index
    %c0_7 = arith.constant 0 : index
    %c0_8 = arith.constant 0 : index
    %c0_9 = arith.constant 0 : index
    %9 = vector.load %arg9[%c0_6, %c0_7, %c0_8, %c0_9] : memref<1x4x8x8xf32, #tpu.memory_space<vmem>>, vector<1x4x8x8xf32>
    %10 = vector.shape_cast %9 : vector<1x4x8x8xf32> to vector<4x8x8xf32>
    %11 = vector.shape_cast %8 : vector<4x8x8xf32> to vector<1x4x8x8xf32>
    tpu.vector_store %arg9[%c0_6, %c0_7, %c0_8, %c0_9], %11 {strides = array<i32>} : memref<1x4x8x8xf32, #tpu.memory_space<vmem>>, vector<1x4x8x8xf32>,
    %c0_10 = arith.constant 0 : index
    %c0_11 = arith.constant 0 : index
    %12 = vector.load %arg4[%c0_10, %c0_11] : memref<32x32xf32, #tpu.memory_space<vmem>>, vector<32x32xf32>
    %cst_12 = arith.constant dense<0.000000e+00> : vector<8x32xf32>
    %13 = tpu.matmul %1, %12, %cst_12 {dimension_numbers = #tpu.dot_dimension_numbers<[1], [0], [0], [1], [0, 0, 1, 1], [], []>} : vector<8x32xf32>, vector<32x32xf32>, vector<8x32xf32> -> vector<8x32xf32>
    %c0_13 = arith.constant 0 : index
    %c0_14 = arith.constant 0 : index
    %14 = vector.load %arg7[%c0_13, %c0_14] : memref<1x32xf32, #tpu.memory_space<vmem>>, vector<1x32xf32>
    %15 = vector.broadcast %14 : vector<1x32xf32> to vector<8x32xf32>
    %16 = arith.addf %13, %15 : vector<8x32xf32>
    %17 = vector.shape_cast %16 : vector<8x32xf32> to vector<8x4x8xf32>
    %18 = tpu.transpose %17, [1, 0, 2] : vector<8x4x8xf32> -> vector<4x8x8xf32>
    %c0_15 = arith.constant 0 : index
    %c0_16 = arith.constant 0 : index
    %c0_17 = arith.constant 0 : index
    %c0_18 = arith.constant 0 : index
    %19 = vector.load %arg10[%c0_15, %c0_16, %c0_17, %c0_18] : memref<1x4x8x8xf32, #tpu.memory_space<vmem>>, vector<1x4x8x8xf32>
    %20 = vector.shape_cast %19 : vector<1x4x8x8xf32> to vector<4x8x8xf32>
    %21 = vector.shape_cast %18 : vector<4x8x8xf32> to vector<1x4x8x8xf32>
    tpu.vector_store %arg10[%c0_15, %c0_16, %c0_17, %c0_18], %21 {strides = array<i32>} : memref<1x4x8x8xf32, #tpu.memory_space<vmem>>, vector<1x4x8x8xf32>,
    %c0_19 = arith.constant 0 : index
    %c0_20 = arith.constant 0 : index
    %22 = vector.load %arg5[%c0_19, %c0_20] : memref<32x32xf32, #tpu.memory_space<vmem>>, vector<32x32xf32>
    %cst_21 = arith.constant dense<0.000000e+00> : vector<8x32xf32>
    %23 = tpu.matmul %1, %22, %cst_21 {dimension_numbers = #tpu.dot_dimension_numbers<[1], [0], [0], [1], [0, 0, 1, 1], [], []>} : vector<8x32xf32>, vector<32x32xf32>, vector<8x32xf32> -> vector<8x32xf32>
    %c0_22 = arith.constant 0 : index
    %c0_23 = arith.constant 0 : index
    %24 = vector.load %arg8[%c0_22, %c0_23] : memref<1x32xf32, #tpu.memory_space<vmem>>, vector<1x32xf32>
    %25 = vector.broadcast %24 : vector<1x32xf32> to vector<8x32xf32>
    %26 = arith.addf %23, %25 : vector<8x32xf32>
    %27 = vector.shape_cast %26 : vector<8x32xf32> to vector<8x4x8xf32>
    %28 = tpu.transpose %27, [1, 0, 2] : vector<8x4x8xf32> -> vector<4x8x8xf32>
    %c0_24 = arith.constant 0 : index
    %c0_25 = arith.constant 0 : index
    %c0_26 = arith.constant 0 : index
    %c0_27 = arith.constant 0 : index
    %29 = vector.load %arg11[%c0_24, %c0_25, %c0_26, %c0_27] : memref<1x4x8x8xf32, #tpu.memory_space<vmem>>, vector<1x4x8x8xf32>
    %30 = vector.shape_cast %29 : vector<1x4x8x8xf32> to vector<4x8x8xf32>
    %31 = vector.shape_cast %28 : vector<4x8x8xf32> to vector<1x4x8x8xf32>
    tpu.vector_store %arg11[%c0_24, %c0_25, %c0_26, %c0_27], %31 {strides = array<i32>} : memref<1x4x8x8xf32, #tpu.memory_space<vmem>>, vector<1x4x8x8xf32>,
    return
  }
  func.func @transform_0(%arg0: i32, %arg1: i32) -> (i32, i32, i32) {
    %c0_i32 = arith.constant 0 : i32
    %c0_i32_0 = arith.constant 0 : i32
    return %arg0, %arg1, %c0_i32 : i32, i32, i32
  }
  func.func @transform_1(%arg0: i32, %arg1: i32) -> (i32, i32) {
    %c0_i32 = arith.constant 0 : i32
    %c0_i32_0 = arith.constant 0 : i32
    %c0_i32_1 = arith.constant 0 : i32
    return %c0_i32, %c0_i32_0 : i32, i32
  }
  func.func @transform_2(%arg0: i32, %arg1: i32) -> (i32, i32) {
    %c0_i32 = arith.constant 0 : i32
    %c0_i32_0 = arith.constant 0 : i32
    %c0_i32_1 = arith.constant 0 : i32
    return %c0_i32, %c0_i32_0 : i32, i32
  }
  func.func @transform_3(%arg0: i32, %arg1: i32) -> (i32, i32) {
    %c0_i32 = arith.constant 0 : i32
    %c0_i32_0 = arith.constant 0 : i32
    %c0_i32_1 = arith.constant 0 : i32
    return %c0_i32, %c0_i32_0 : i32, i32
  }
  func.func @transform_4(%arg0: i32, %arg1: i32) -> (i32, i32) {
    %c0_i32 = arith.constant 0 : i32
    %c0_i32_0 = arith.constant 0 : i32
    %c0_i32_1 = arith.constant 0 : i32
    return %c0_i32, %c0_i32_0 : i32, i32
  }
  func.func @transform_5(%arg0: i32, %arg1: i32) -> (i32, i32) {
    %c0_i32 = arith.constant 0 : i32
    %c0_i32_0 = arith.constant 0 : i32
    %c0_i32_1 = arith.constant 0 : i32
    return %c0_i32, %c0_i32_0 : i32, i32
  }
  func.func @transform_6(%arg0: i32, %arg1: i32) -> (i32, i32) {
    %c0_i32 = arith.constant 0 : i32
    %c0_i32_0 = arith.constant 0 : i32
    %c0_i32_1 = arith.constant 0 : i32
    return %c0_i32, %c0_i32_0 : i32, i32
  }
  func.func @transform_7(%arg0: i32, %arg1: i32) -> (i32, i32, i32, i32) {
    %c0_i32 = arith.constant 0 : i32
    %c0_i32_0 = arith.constant 0 : i32
    %c0_i32_1 = arith.constant 0 : i32
    return %arg0, %c0_i32, %arg1, %c0_i32_0 : i32, i32, i32, i32
  }
  func.func @transform_8(%arg0: i32, %arg1: i32) -> (i32, i32, i32, i32) {
    %c0_i32 = arith.constant 0 : i32
    %c0_i32_0 = arith.constant 0 : i32
    %c0_i32_1 = arith.constant 0 : i32
    return %arg0, %c0_i32, %arg1, %c0_i32_0 : i32, i32, i32, i32
  }
  func.func @transform_9(%arg0: i32, %arg1: i32) -> (i32, i32, i32, i32) {
    %c0_i32 = arith.constant 0 : i32
    %c0_i32_0 = arith.constant 0 : i32
    %c0_i32_1 = arith.constant 0 : i32
    return %arg0, %c0_i32, %arg1, %c0_i32_0 : i32, i32, i32, i32
  }
}

</mosaic_0001>

<llo_original>
// kernel: tpu_custom_call.1
$region0: #{tpu_custom_call.1}
  #allocation0 [shape = 'u32[]', space=smem, size = 0x4, offset = 0x4, fixed_abs, tag = 'smem constant byte address 0x4 - core index']
  #allocation1 [shape = 'u32[144,128]{1,0:T(1,128)}', space=vmem, size = 0x12000, scoped, tag = 'internal scratch']
  %s0 = inlined_call_operand.hbm [shape: f32[2,8,32], index: 0, kind: input, shape index: {}]
  %s1 = inlined_call_operand.hbm [shape: f32[32,32], index: 1, kind: input, shape index: {}]
  %s2 = inlined_call_operand.hbm [shape: f32[32,32], index: 2, kind: input, shape index: {}]
  %s3 = inlined_call_operand.hbm [shape: f32[32,32], index: 3, kind: input, shape index: {}]
  %s4 = inlined_call_operand.vmem [shape: f32[1,32], index: 4, kind: input, shape index: {}]
  %s5 = inlined_call_operand.vmem [shape: f32[1,32], index: 5, kind: input, shape index: {}]
  %s6 = inlined_call_operand.vmem [shape: f32[1,32], index: 6, kind: input, shape index: {}]
  %s7 = inlined_call_operand.hbm [shape: f32[2,4,8,8], index: 7, kind: output, shape index: {0}]
  %s8 = inlined_call_operand.hbm [shape: f32[2,4,8,8], index: 8, kind: output, shape index: {1}]
  %s9 = inlined_call_operand.hbm [shape: f32[2,4,8,8], index: 9, kind: output, shape index: {2}]
  %10 = xla_tuple %s7, %s8, %s9
  %s11 = sld [smem:[#allocation0]]
  $region93: #{tpu_custom_call.1} parent=0
    _
  %s13 = ssub.s32 1, %s11
  %s14 = scalar_select 0, %s13, %s11
  $region1: #{tpu_custom_call.1} parent=0
    #allocation2 [shape = 'u8[8192]{0}', space=vmem, size = 0x2000, scoped, tag = 'input window, operand 0']
    #allocation3 [shape = 's32[2]{0}', space=sflag, size = 0x8, scoped, tag = 'scoped memory for tpu_custom_call.1']
    #allocation4 [shape = 's32[2]{0}', space=sflag, size = 0x8, scoped, tag = 'scoped memory for tpu_custom_call.1']
    #allocation5 [shape = 'u8[16384]{0}', space=vmem, size = 0x4000, scoped, tag = 'input window, operand 1, single buffered']
    #allocation6 [shape = 's32[1]{0}', space=sflag, size = 0x4, scoped, tag = 'scoped memory for tpu_custom_call.1']
    #allocation7 [shape = 'u8[16384]{0}', space=vmem, size = 0x4000, scoped, tag = 'input window, operand 2, single buffered']
    #allocation8 [shape = 'u8[16384]{0}', space=vmem, size = 0x4000, scoped, tag = 'input window, operand 3, single buffered']
    #allocation9 [shape = 's32[1]{0}', space=sflag, size = 0x4, scoped, tag = 'scoped memory for tpu_custom_call.1']
    #allocation10 [shape = 'u8[32768]{0}', space=vmem, size = 0x8000, scoped, tag = 'output window, operand 0']
    #allocation11 [shape = 'u8[32768]{0}', space=vmem, size = 0x8000, scoped, tag = 'output window, operand 1']
    #allocation12 [shape = 's32[2]{0}', space=sflag, size = 0x8, scoped, tag = 'scoped memory for tpu_custom_call.1']
    #allocation13 [shape = 'u8[32768]{0}', space=vmem, size = 0x8000, scoped, tag = 'output window, operand 2']
    %15 = vsyncpa [#allocation3], 0
    %s16 = scalar_lea.sflag [#allocation3], 1
    %17 = vsyncpa %s16, 0
    %18 = vsyncpa [#allocation6], 0
    %19 = vsyncpa [#allocation9], 0
    %20 = vsyncpa [#allocation4], 0
    %s21 = scalar_lea.sflag [#allocation4], 1
    %22 = vsyncpa %s21, 0
    %23 = vsyncpa [#allocation12], 0
    %s24 = scalar_lea.sflag [#allocation12], 1
    %25 = vsyncpa %s24, 0
    loop: start=0, step=1, limit=4
    $region2: #{tpu_custom_call.1} parent=1 // loop_pre_header
      _
    $region3: #{tpu_custom_call.1} parent=1 // loop_header
      %s27 = sphi 0, %s31
      %p28 = scmp.ge.s32.totalorder %s27, 4
      %s34 = sphi 0, %s46
      %s35 = sphi 0, %s42
      %s36 = sphi 0, %s34
      %s37 = sphi 0, %s35
      %s38 = sphi 0, %s36
      %s39 = sphi 0, %s37
      %s51 = sphi 0, %s53
      %s54 = sphi 0, %s51
      %s55 = sphi 0, %s54
      %s71 = sphi 0, %s55
      %s75 = sphi 0, %s75
      %s77 = sphi 0, %s75
      %s78 = sphi 0, %s77
      %s92 = sphi 0, %s78
      %s96 = sphi 0, %s96
      %s98 = sphi 0, %s96
      %s99 = sphi 0, %s98
      %s113 = sphi 0, %s99
      %s117 = sphi 0, %s117
      %s119 = sphi 0, %s117
      %s120 = sphi 0, %s119
      %s134 = sphi 0, %s120
      %s138 = sphi 0, %s138
      %s140 = sphi 0, %s138
      %s141 = sphi 0, %s140
      %s155 = sphi 0, %s141
      %s159 = sphi 0, %s159
      %s161 = sphi 0, %s159
      %s162 = sphi 0, %s161
      %s176 = sphi 0, %s162
      %s180 = sphi 0, %s180
      %s182 = sphi 0, %s180
      %s183 = sphi 0, %s182
      %s197 = sphi 0, %s183
      %s205 = sphi 0, %s207
      %s208 = sphi 0, %s205
      %s209 = sphi 0, %s208
      %s225 = sphi 0, %s209
      %s233 = sphi 0, %s235
      %s236 = sphi 0, %s233
      %s237 = sphi 0, %s236
      %s253 = sphi 0, %s237
      %s261 = sphi 0, %s263
      %s264 = sphi 0, %s261
      %s265 = sphi 0, %s264
      %s281 = sphi 0, %s265
    $region4: #{tpu_custom_call.1} parent=1 // loop_header_branch
      %30 = sbr.rel (%p28) target = $region8
    $region5: #{tpu_custom_call.1} parent=1 // loop_body
      %s32 = ssub.s32 %s27, 1
      %s33 = ssub.s32 %s27, 2
      %s40 = sadd.s32 1, %s35
      %p41 = scmp.ge.s32.totalorder %s40, 1
      %s42 = scalar_select %p41, 0, %s40
      %s43 = sadd.s32 1, %s34
      %s44 = scalar_select %p41, %s43, %s34
      %p45 = scmp.ge.s32.totalorder %s44, 2
      %s46 = scalar_select %p45, 0, %s44
      %s47 = ssub.s32 %s34, %s46
      %s48 = ssub.s32 %s35, %s42
      %s49 = sor.u32 %s47, %s48
      %p50 = scmp.eq.s32.totalorder %s49, 0
      %s52 = sadd.s32 %s51, 1
      %s53 = scalar_select %p50, %s51, %s52
      %p56 = pneg %p50
      %p57 = scmp.eq.s32.totalorder %s27, 1
      %p58 = por %p56, %p57
      %p59 = scmp.ne.s32.totalorder %s51, %s54
      %p60 = scmp.eq.s32.totalorder %s27, 0
      %p61 = por %p59, %p60
      %p62 = scmp.ne.s32.totalorder %s51, %s54
      %p63 = scmp.eq.s32.totalorder %s32, 1
      %p64 = por %p62, %p63
      %p65 = scmp.ne.s32.totalorder %s54, %s55
      %p66 = scmp.eq.s32.totalorder %s32, 0
      %p67 = por %p65, %p66
      %p68 = scmp.ne.s32.totalorder %s54, %s55
      %p69 = scmp.eq.s32.totalorder %s33, 1
      %p70 = por %p68, %p69
      %p72 = scmp.ne.s32.totalorder %s55, %s71
      %p73 = scmp.eq.s32.totalorder %s33, 0
      %p74 = por %p72, %p73
      %s76 = sadd.s32 %s75, 1
      %p79 = scmp.eq.s32.totalorder %s27, 1
      %p80 = scmp.ne.s32.totalorder %s75, %s77
      %p81 = scmp.eq.s32.totalorder %s27, 0
      %p82 = por %p80, %p81
      %p83 = scmp.ne.s32.totalorder %s75, %s77
      %p84 = scmp.eq.s32.totalorder %s32, 1
      %p85 = por %p83, %p84
      %p86 = scmp.ne.s32.totalorder %s77, %s78
      %p87 = scmp.eq.s32.totalorder %s32, 0
      %p88 = por %p86, %p87
      %p89 = scmp.ne.s32.totalorder %s77, %s78
      %p90 = scmp.eq.s32.totalorder %s33, 1
      %p91 = por %p89, %p90
      %p93 = scmp.ne.s32.totalorder %s78, %s92
      %p94 = scmp.eq.s32.totalorder %s33, 0
      %p95 = por %p93, %p94
      %s97 = sadd.s32 %s96, 1
      %p100 = scmp.eq.s32.totalorder %s27, 1
      %p101 = scmp.ne.s32.totalorder %s96, %s98
      %p102 = scmp.eq.s32.totalorder %s27, 0
      %p103 = por %p101, %p102
      %p104 = scmp.ne.s32.totalorder %s96, %s98
      %p105 = scmp.eq.s32.totalorder %s32, 1
      %p106 = por %p104, %p105
      %p107 = scmp.ne.s32.totalorder %s98, %s99
      %p108 = scmp.eq.s32.totalorder %s32, 0
      %p109 = por %p107, %p108
      %p110 = scmp.ne.s32.totalorder %s98, %s99
      %p111 = scmp.eq.s32.totalorder %s33, 1
      %p112 = por %p110, %p111
      %p114 = scmp.ne.s32.totalorder %s99, %s113
      %p115 = scmp.eq.s32.totalorder %s33, 0
      %p116 = por %p114, %p115
      %s118 = sadd.s32 %s117, 1
      %p121 = scmp.eq.s32.totalorder %s27, 1
      %p122 = scmp.ne.s32.totalorder %s117, %s119
      %p123 = scmp.eq.s32.totalorder %s27, 0
      %p124 = por %p122, %p123
      %p125 = scmp.ne.s32.totalorder %s117, %s119
      %p126 = scmp.eq.s32.totalorder %s32, 1
      %p127 = por %p125, %p126
      %p128 = scmp.ne.s32.totalorder %s119, %s120
      %p129 = scmp.eq.s32.totalorder %s32, 0
      %p130 = por %p128, %p129
      %p131 = scmp.ne.s32.totalorder %s119, %s120
      %p132 = scmp.eq.s32.totalorder %s33, 1
      %p133 = por %p131, %p132
      %p135 = scmp.ne.s32.totalorder %s120, %s134
      %p136 = scmp.eq.s32.totalorder %s33, 0
      %p137 = por %p135, %p136
      %s139 = sadd.s32 %s138, 1
      %p142 = scmp.eq.s32.totalorder %s27, 1
      %p143 = scmp.ne.s32.totalorder %s138, %s140
      %p144 = scmp.eq.s32.totalorder %s27, 0
      %p145 = por %p143, %p144
      %p146 = scmp.ne.s32.totalorder %s138, %s140
      %p147 = scmp.eq.s32.totalorder %s32, 1
      %p148 = por %p146, %p147
      %p149 = scmp.ne.s32.totalorder %s140, %s141
      %p150 = scmp.eq.s32.totalorder %s32, 0
      %p151 = por %p149, %p150
      %p152 = scmp.ne.s32.totalorder %s140, %s141
      %p153 = scmp.eq.s32.totalorder %s33, 1
      %p154 = por %p152, %p153
      %p156 = scmp.ne.s32.totalorder %s141, %s155
      %p157 = scmp.eq.s32.totalorder %s33, 0
      %p158 = por %p156, %p157
      %s160 = sadd.s32 %s159, 1
      %p163 = scmp.eq.s32.totalorder %s27, 1
      %p164 = scmp.ne.s32.totalorder %s159, %s161
      %p165 = scmp.eq.s32.totalorder %s27, 0
      %p166 = por %p164, %p165
      %p167 = scmp.ne.s32.totalorder %s159, %s161
      %p168 = scmp.eq.s32.totalorder %s32, 1
      %p169 = por %p167, %p168
      %p170 = scmp.ne.s32.totalorder %s161, %s162
      %p171 = scmp.eq.s32.totalorder %s32, 0
      %p172 = por %p170, %p171
      %p173 = scmp.ne.s32.totalorder %s161, %s162
      %p174 = scmp.eq.s32.totalorder %s33, 1
      %p175 = por %p173, %p174
      %p177 = scmp.ne.s32.totalorder %s162, %s176
      %p178 = scmp.eq.s32.totalorder %s33, 0
      %p179 = por %p177, %p178
      %s181 = sadd.s32 %s180, 1
      %p184 = scmp.eq.s32.totalorder %s27, 1
      %p185 = scmp.ne.s32.totalorder %s180, %s182
      %p186 = scmp.eq.s32.totalorder %s27, 0
      %p187 = por %p185, %p186
      %p188 = scmp.ne.s32.totalorder %s180, %s182
      %p189 = scmp.eq.s32.totalorder %s32, 1
      %p190 = por %p188, %p189
      %p191 = scmp.ne.s32.totalorder %s182, %s183
      %p192 = scmp.eq.s32.totalorder %s32, 0
      %p193 = por %p191, %p192
      %p194 = scmp.ne.s32.totalorder %s182, %s183
      %p195 = scmp.eq.s32.totalorder %s33, 1
      %p196 = por %p194, %p195
      %p198 = scmp.ne.s32.totalorder %s183, %s197
      %p199 = scmp.eq.s32.totalorder %s33, 0
      %p200 = por %p198, %p199
      %s201 = ssub.s32 %s34, %s46
      %s202 = ssub.s32 %s35, %s42
      %s203 = sor.u32 %s201, %s202
      %p204 = scmp.eq.s32.totalorder %s203, 0
      %s206 = sadd.s32 %s205, 1
      %s207 = scalar_select %p204, %s205, %s206
      %p210 = pneg %p204
      %p211 = scmp.eq.s32.totalorder %s27, 1
      %p212 = por %p210, %p211
      %p213 = scmp.ne.s32.totalorder %s205, %s208
      %p214 = scmp.eq.s32.totalorder %s27, 0
      %p215 = por %p213, %p214
      %p216 = scmp.ne.s32.totalorder %s205, %s208
      %p217 = scmp.eq.s32.totalorder %s32, 1
      %p218 = por %p216, %p217
      %p219 = scmp.ne.s32.totalorder %s208, %s209
      %p220 = scmp.eq.s32.totalorder %s32, 0
      %p221 = por %p219, %p220
      %p222 = scmp.ne.s32.totalorder %s208, %s209
      %p223 = scmp.eq.s32.totalorder %s33, 1
      %p224 = por %p222, %p223
      %p226 = scmp.ne.s32.totalorder %s209, %s225
      %p227 = scmp.eq.s32.totalorder %s33, 0
      %p228 = por %p226, %p227
      %s229 = ssub.s32 %s34, %s46
      %s230 = ssub.s32 %s35, %s42
      %s231 = sor.u32 %s229, %s230
      %p232 = scmp.eq.s32.totalorder %s231, 0
      %s234 = sadd.s32 %s233, 1
      %s235 = scalar_select %p232, %s233, %s234
      %p238 = pneg %p232
      %p239 = scmp.eq.s32.totalorder %s27, 1
      %p240 = por %p238, %p239
      %p241 = scmp.ne.s32.totalorder %s233, %s236
      %p242 = scmp.eq.s32.totalorder %s27, 0
      %p243 = por %p241, %p242
      %p244 = scmp.ne.s32.totalorder %s233, %s236
      %p245 = scmp.eq.s32.totalorder %s32, 1
      %p246 = por %p244, %p245
      %p247 = scmp.ne.s32.totalorder %s236, %s237
      %p248 = scmp.eq.s32.totalorder %s32, 0
      %p249 = por %p247, %p248
      %p250 = scmp.ne.s32.totalorder %s236, %s237
      %p251 = scmp.eq.s32.totalorder %s33, 1
      %p252 = por %p250, %p251
      %p254 = scmp.ne.s32.totalorder %s237, %s253
      %p255 = scmp.eq.s32.totalorder %s33, 0
      %p256 = por %p254, %p255
      %s257 = ssub.s32 %s34, %s46
      %s258 = ssub.s32 %s35, %s42
      %s259 = sor.u32 %s257, %s258
      %p260 = scmp.eq.s32.totalorder %s259, 0
      %s262 = sadd.s32 %s261, 1
      %s263 = scalar_select %p260, %s261, %s262
      %p266 = pneg %p260
      %p267 = scmp.eq.s32.totalorder %s27, 1
      %p268 = por %p266, %p267
      %p269 = scmp.ne.s32.totalorder %s261, %s264
      %p270 = scmp.eq.s32.totalorder %s27, 0
      %p271 = por %p269, %p270
      %p272 = scmp.ne.s32.totalorder %s261, %s264
      %p273 = scmp.eq.s32.totalorder %s32, 1
      %p274 = por %p272, %p273
      %p275 = scmp.ne.s32.totalorder %s264, %s265
      %p276 = scmp.eq.s32.totalorder %s32, 0
      %p277 = por %p275, %p276
      %p278 = scmp.ne.s32.totalorder %s264, %s265
      %p279 = scmp.eq.s32.totalorder %s33, 1
      %p280 = por %p278, %p279
      %p282 = scmp.ne.s32.totalorder %s265, %s281
      %p283 = scmp.eq.s32.totalorder %s33, 0
      %p284 = por %p282, %p283
      %p285 = scmp.le.s32.totalorder 1, %s27
      %p286 = scmp.lt.s32.totalorder %s27, 3
      %p287 = pnand %p285, %p286
      %p288 = pneg %p287
      // Predicated region
      $region9: #{tpu_custom_call.1} parent=5 // pred_check
        _
      $region10: #{tpu_custom_call.1} parent=5 // pred_check_branch
        %290 = sbr.rel (%p287) target = $region12
      $region11: #{tpu_custom_call.1} parent=5 // pred_region
        %s291 = ssub.s32 %s27, 1
        // Predicated region
        $region13: #{tpu_custom_call.1} parent=11 // pred_check
          %p292 = pneg %p88
        $region14: #{tpu_custom_call.1} parent=11 // pred_check_branch
          %294 = sbr.rel (%p292) target = $region16
        $region15: #{tpu_custom_call.1} parent=11 // pred_region
          %s296 = ssub.s32 512, 512
          %297 = vsyncadd [#allocation6], %s296
          %s298 = sshll.u32 [#allocation5], 4
          %s299 = int_to_ptr.vmem [resolvable:$true] %s298
          %304 = dma.hbm_to_vmem [thread:$0]  %s1, 512, %s299, [#allocation6], 128, 128, 8
        $region16: #{tpu_custom_call.1} parent=11 // pred_fallthru
          _
        // Predicated region
        $region17: #{tpu_custom_call.1} parent=11 // pred_check
          %p305 = pneg %p109
        $region18: #{tpu_custom_call.1} parent=11 // pred_check_branch
          %307 = sbr.rel (%p305) target = $region20
        $region19: #{tpu_custom_call.1} parent=11 // pred_region
          %s309 = ssub.s32 512, 512
          %310 = vsyncadd [#allocation6], %s309
          %s311 = sshll.u32 [#allocation7], 4
          %s312 = int_to_ptr.vmem [resolvable:$true] %s311
          %317 = dma.hbm_to_vmem [thread:$0]  %s2, 512, %s312, [#allocation6], 128, 128, 8
        $region20: #{tpu_custom_call.1} parent=11 // pred_fallthru
          _
        // Predicated region
        $region21: #{tpu_custom_call.1} parent=11 // pred_check
          %p318 = pneg %p130
        $region22: #{tpu_custom_call.1} parent=11 // pred_check_branch
          %320 = sbr.rel (%p318) target = $region24
        $region23: #{tpu_custom_call.1} parent=11 // pred_region
          %s322 = ssub.s32 512, 512
          %323 = vsyncadd [#allocation9], %s322
          %s324 = sshll.u32 [#allocation8], 4
          %s325 = int_to_ptr.vmem [resolvable:$true] %s324
          %330 = dma.hbm_to_vmem [thread:$0]  %s3, 512, %s325, [#allocation9], 128, 128, 8
        $region24: #{tpu_custom_call.1} parent=11 // pred_fallthru
          _
        // Predicated region
        $region25: #{tpu_custom_call.1} parent=11 // pred_check
          %p331 = pneg %p151
        $region26: #{tpu_custom_call.1} parent=11 // pred_check_branch
          %333 = sbr.rel (%p331) target = $region28
        $region27: #{tpu_custom_call.1} parent=11 // pred_region
          _
        $region28: #{tpu_custom_call.1} parent=11 // pred_fallthru
          _
        // Predicated region
        $region29: #{tpu_custom_call.1} parent=11 // pred_check
          %p334 = pneg %p172
        $region30: #{tpu_custom_call.1} parent=11 // pred_check_branch
          %336 = sbr.rel (%p334) target = $region32
        $region31: #{tpu_custom_call.1} parent=11 // pred_region
          _
        $region32: #{tpu_custom_call.1} parent=11 // pred_fallthru
          _
        // Predicated region
        $region33: #{tpu_custom_call.1} parent=11 // pred_check
          %p337 = pneg %p193
        $region34: #{tpu_custom_call.1} parent=11 // pred_check_branch
          %339 = sbr.rel (%p337) target = $region36
        $region35: #{tpu_custom_call.1} parent=11 // pred_region
          _
        $region36: #{tpu_custom_call.1} parent=11 // pred_fallthru
          _
      $region12: #{tpu_custom_call.1} parent=5 // pred_fallthru
        _
      %p340 = scmp.lt.s32.totalorder %s27, 2
      // Predicated region
      $region37: #{tpu_custom_call.1} parent=5 // pred_check
        %p341 = pneg %p340
      $region38: #{tpu_custom_call.1} parent=5 // pred_check_branch
        %343 = sbr.rel (%p341) target = $region40
      $region39: #{tpu_custom_call.1} parent=5 // pred_region
        // Predicated region
        $region41: #{tpu_custom_call.1} parent=39 // pred_check
          %p344 = pneg %p61
        $region42: #{tpu_custom_call.1} parent=39 // pred_check_branch
          %346 = sbr.rel (%p344) target = $region44
        $region43: #{tpu_custom_call.1} parent=39 // pred_region
          %s347 = sand.u32 %s51, 1
          %s348 = scalar_lea.sflag [#allocation3], %s347
          %s349 = sand.u32 %s51, 1
          %s350 = smul.addr %s349, 8
          %s351 = scalar_lea.vmem [#allocation2], %s350
          %s353 = ssub.s32 128, 128
          %354 = vsyncadd %s348, %s353
          %s355 = sadd.s32 %s35, %s34
          %s356 = smul.addr %s355, 128
          %s357 = scalar_lea.hbm %s0, %s356
          %s359 = sshll.u32 %s351, 4
          %s360 = int_to_ptr.vmem [resolvable:$true] %s359
          %362 = dma.hbm_to_vmem [thread:$0]  %s357, 128, %s360, %s348
        $region44: #{tpu_custom_call.1} parent=39 // pred_fallthru
          _
      $region40: #{tpu_custom_call.1} parent=5 // pred_fallthru
        _
      %p363 = scmp.le.s32.totalorder 1, %s27
      %p364 = scmp.lt.s32.totalorder %s27, 3
      %p365 = pnand %p363, %p364
      %p366 = pneg %p365
      // Predicated region
      $region45: #{tpu_custom_call.1} parent=5 // pred_check
        _
      $region46: #{tpu_custom_call.1} parent=5 // pred_check_branch
        %368 = sbr.rel (%p365) target = $region48
      $region47: #{tpu_custom_call.1} parent=5 // pred_region
        %s369 = ssub.s32 %s27, 1
        %s370 = sand.u32 %s54, 1
        %s371 = scalar_lea.sflag [#allocation3], %s370
        %s372 = sand.u32 %s54, 1
        %s373 = smul.addr %s372, 8
        %s374 = scalar_lea.vmem [#allocation2], %s373
        // Predicated region
        $region49: #{tpu_custom_call.1} parent=47 // pred_check
          %p375 = pneg %p67
        $region50: #{tpu_custom_call.1} parent=47 // pred_check_branch
          %377 = sbr.rel (%p375) target = $region52
        $region51: #{tpu_custom_call.1} parent=47 // pred_region
          %378 = dma.done %s371, 128
        $region52: #{tpu_custom_call.1} parent=47 // pred_fallthru
          _
        // Predicated region
        $region53: #{tpu_custom_call.1} parent=47 // pred_check
          %p379 = pneg %p88
        $region54: #{tpu_custom_call.1} parent=47 // pred_check_branch
          %381 = sbr.rel (%p379) target = $region56
        $region55: #{tpu_custom_call.1} parent=47 // pred_region
          %382 = dma.done [#allocation6], 512
        $region56: #{tpu_custom_call.1} parent=47 // pred_fallthru
          _
        // Predicated region
        $region57: #{tpu_custom_call.1} parent=47 // pred_check
          %p383 = pneg %p109
        $region58: #{tpu_custom_call.1} parent=47 // pred_check_branch
          %385 = sbr.rel (%p383) target = $region60
        $region59: #{tpu_custom_call.1} parent=47 // pred_region
          %386 = dma.done [#allocation6], 512
        $region60: #{tpu_custom_call.1} parent=47 // pred_fallthru
          _
        // Predicated region
        $region61: #{tpu_custom_call.1} parent=47 // pred_check
          %p387 = pneg %p130
        $region62: #{tpu_custom_call.1} parent=47 // pred_check_branch
          %389 = sbr.rel (%p387) target = $region64
        $region63: #{tpu_custom_call.1} parent=47 // pred_region
          %390 = dma.done [#allocation9], 512
        $region64: #{tpu_custom_call.1} parent=47 // pred_fallthru
          _
        %s391 = sand.u32 %s54, 1
        %s392 = scalar_lea.sflag [#allocation3], %s391
        %s393 = sand.u32 %s54, 1
        %s394 = smul.addr %s393, 8
        %s395 = scalar_lea.vmem [#allocation2], %s394
        %p396 = pneg %p67
        %p397 = pneg %p64
        %p398 = pneg %p88
        %p399 = pneg %p85
        %p400 = pneg %p109
        %p401 = pneg %p106
        %p402 = pneg %p130
        %p403 = pneg %p127
        %p404 = pneg %p151
        %p405 = pneg %p148
        %p406 = pneg %p172
        %p407 = pneg %p169
        %p408 = pneg %p193
        %p409 = pneg %p190
        %p410 = pneg %p221
        %p411 = pneg %p218
        %s412 = sand.u32 %s208, 1
        %s413 = scalar_lea.sflag [#allocation4], %s412
        %s414 = sand.u32 %s208, 1
        %s415 = smul.addr %s414, 32
        %s416 = scalar_lea.vmem [#allocation10], %s415
        %p417 = pneg %p249
        %p418 = pneg %p246
        %s419 = sand.u32 %s32, 1
        %s420 = scalar_lea.sflag [#allocation12], %s419
        %s421 = sand.u32 %s236, 1
        %s422 = smul.addr %s421, 32
        %s423 = scalar_lea.vmem [#allocation11], %s422
        %p424 = pneg %p277
        %p425 = pneg %p274
        %s426 = sand.u32 %s32, 1
        %s427 = scalar_lea.sflag [#allocation12], %s426
        %s428 = sand.u32 %s264, 1
        %s429 = smul.addr %s428, 32
        %s430 = scalar_lea.vmem [#allocation13], %s429
        %v431 = vld [vmem:[%s374] sm:$0xff]
        %v432 = vld [vmem:[#allocation5] sm:$0xff]
        %v433 = vld [vmem:[#allocation5 + $0x8] sm:$0xff]
        %v434 = vld [vmem:[#allocation5 + $0x10] sm:$0xff]
        %v435 = vld [vmem:[#allocation5 + $0x18] sm:$0xff]
        %v436 = vld [vmem:[%s4] sm:$0x1]
        %v438 = vlaneseq
        %v439 = vshrl.u32 %v438, 7
        %v440 = vsub.s32 0, %v439
        %v441 = vrot.slane %v436, %v440
        %vm443 = vcmask 261120
        %v445 = vsel %vm443, %v431, 0
        %447 = vmatprep.subr.mxu0 0.0
        %448 = vmatpush1.msra.mxu0 0.0
        %449 = vmatprep.subr.mxu0 0.0
        %450 = vmatpush1.msra.mxu0 0.0
        %451 = vmatprep.subr.mxu0 0.0
        %452 = vmatpush1.msra.mxu0 0.0
        %453 = vmatprep.subr.mxu0 0.0
        %454 = vmatpush1.msra.mxu0 0.0
        %455 = vmatprep.subr.mxu0 0.0
        %456 = vmatpush1.msra.mxu0 0.0
        %457 = vmatprep.subr.mxu0 0.0
        %458 = vmatpush1.msra.mxu0 0.0
        %459 = vmatprep.subr.mxu0 0.0
        %460 = vmatpush1.msra.mxu0 0.0
        %461 = vmatprep.subr.mxu0 0.0
        %462 = vmatpush1.msra.mxu0 0.0
        %463 = vmatprep.subr.mxu0 0.0
        %464 = vmatpush1.msra.mxu0 0.0
        %465 = vmatprep.subr.mxu0 0.0
        %466 = vmatpush1.msra.mxu0 0.0
        %467 = vmatprep.subr.mxu0 0.0
        %468 = vmatpush1.msra.mxu0 0.0
        %469 = vmatprep.subr.mxu0 0.0
        %470 = vmatpush1.msra.mxu0 0.0
        %471 = vmatprep.subr.mxu0 0.0
        %472 = vmatpush1.msra.mxu0 %v435
        %473 = vmatprep.subr.mxu0 0.0
        %474 = vmatpush1.msra.mxu0 %v434
        %475 = vmatprep.subr.mxu0 0.0
        %476 = vmatpush1.msra.mxu0 %v433
        %477 = vmatprep.subr.mxu0 0.0
        %478 = vmatpush1.msra.mxu0 %v432
        %479 = vmatprep.subr.mxu0 0.0
        %480 = vmatpush2.msra.mxu0 0.0
        %481 = vmatprep.subr.mxu0 0.0
        %482 = vmatpush2.msra.mxu0 0.0
        %483 = vmatprep.subr.mxu0 0.0
        %484 = vmatpush2.msra.mxu0 0.0
        %485 = vmatprep.subr.mxu0 0.0
        %486 = vmatpush2.msra.mxu0 0.0
        %487 = vmatprep.subr.mxu0 0.0
        %488 = vmatpush2.msra.mxu0 0.0
        %489 = vmatprep.subr.mxu0 0.0
        %490 = vmatpush2.msra.mxu0 0.0
        %491 = vmatprep.subr.mxu0 0.0
        %492 = vmatpush2.msra.mxu0 0.0
        %493 = vmatprep.subr.mxu0 0.0
        %494 = vmatpush2.msra.mxu0 0.0
        %495 = vmatprep.subr.mxu0 0.0
        %496 = vmatpush2.msra.mxu0 0.0
        %497 = vmatprep.subr.mxu0 0.0
        %498 = vmatpush2.msra.mxu0 0.0
        %499 = vmatprep.subr.mxu0 0.0
        %500 = vmatpush2.msra.mxu0 0.0
        %501 = vmatprep.subr.mxu0 0.0
        %502 = vmatpush2.msra.mxu0 0.0
        %503 = vmatprep.subr.mxu0 0.0
        %504 = vmatpush2.msra.mxu0 0.0
        %505 = vmatprep.subr.mxu0 0.0
        %506 = vmatpush2.msra.mxu0 0.0
        %507 = vmatprep.subr.mxu0 0.0
        %508 = vmatpush2.msra.mxu0 0.0
        %509 = vmatprep.subr.mxu0 0.0
        %510 = vmatpush2.msra.mxu0 0.0
        %511 = vmatprep.mubr.f32.mxu0 0.0
        %512 = vmatmul.mubr.f32.gmra.mxu0 %v445
        %v513 = vpop.f32.mrf.mxu0
        %v514 = vadd.f32 %v441, %v513
        %v515 = vpop.f32.mrf.mxu0
        %516 = vdwg.mxu0
        %518 = vrot.lane.b32.xlu0 %v514, 120
        %v519 = vpop.permute.xlu0 %518
        %521 = vrot.lane.b32.xlu0 %v514, 112
        %v522 = vpop.permute.xlu0 %521
        %524 = vrot.lane.b32.xlu0 %v514, 104
        %v525 = vpop.permute.xlu0 %524
        %v527 = vcombine.low %v514, %v522
        %v528 = vcombine.high %v514, %v522
        %v530 = vunpack.c.l.s4 1983009808
        %v531 = vunpack.c.0.s8 %v530
        %v532 = vlaneseq
        %v533 = vshrl.u32 %v532, 7
        %v534 = vsub.s32 %v531, %v533
        %v535 = vrot.slane %v527, %v534
        %v537 = vunpack.c.l.s4 1983009808
        %v538 = vunpack.c.0.s8 %v537
        %v539 = vlaneseq
        %v540 = vshrl.u32 %v539, 7
        %v541 = vsub.s32 %v538, %v540
        %v542 = vrot.slane %v528, %v541
        %v543 = vcombine.low %v519, %v525
        %v544 = vcombine.high %v519, %v525
        %v546 = vunpack.c.l.s4 1983009808
        %v547 = vunpack.c.0.s8 %v546
        %v548 = vlaneseq
        %v549 = vshrl.u32 %v548, 7
        %v550 = vsub.s32 %v547, %v549
        %v551 = vrot.slane %v543, %v550
        %v553 = vunpack.c.l.s4 1983009808
        %v554 = vunpack.c.0.s8 %v553
        %v555 = vlaneseq
        %v556 = vshrl.u32 %v555, 7
        %v557 = vsub.s32 %v554, %v556
        %v558 = vrot.slane %v544, %v557
        %v559 = vcombine.low %v535, %v551
        %v560 = vcombine.high %v535, %v551
        %v562 = vunpack.c.l.s4 1934713408
        %v563 = vunpack.c.0.s8 %v562
        %v564 = vlaneseq
        %v565 = vshrl.u32 %v564, 7
        %v566 = vsub.s32 %v563, %v565
        %v567 = vrot.slane %v559, %v566
        %v569 = vunpack.c.l.s4 1934713408
        %v570 = vunpack.c.0.s8 %v569
        %v571 = vlaneseq
        %v572 = vshrl.u32 %v571, 7
        %v573 = vsub.s32 %v570, %v572
        %v574 = vrot.slane %v560, %v573
        %v575 = vcombine.low %v542, %v558
        %v576 = vcombine.high %v542, %v558
        %v578 = vunpack.c.l.s4 1934713408
        %v579 = vunpack.c.0.s8 %v578
        %v580 = vlaneseq
        %v581 = vshrl.u32 %v580, 7
        %v582 = vsub.s32 %v579, %v581
        %v583 = vrot.slane %v575, %v582
        %v585 = vunpack.c.l.s4 1934713408
        %v586 = vunpack.c.0.s8 %v585
        %v587 = vlaneseq
        %v588 = vshrl.u32 %v587, 7
        %v589 = vsub.s32 %v586, %v588
        %v590 = vrot.slane %v576, %v589
        %v591 = vcombine.high %v567, 0.0
        %v592 = vcombine.high %v574, 0.0
        %v593 = vcombine.high %v583, 0.0
        %v594 = vcombine.high %v590, 0.0
        %v595 = vcombine.low %v567, %v574
        %v597 = vunpack.c.l.s4 1983009808
        %v598 = vunpack.c.0.s8 %v597
        %v599 = vlaneseq
        %v600 = vshrl.u32 %v599, 7
        %v601 = vsub.s32 %v598, %v600
        %v602 = vrot.slane %v595, %v601
        %v603 = vcombine.low %v591, %v592
        %v605 = vunpack.c.l.s4 1983009808
        %v606 = vunpack.c.0.s8 %v605
        %v607 = vlaneseq
        %v608 = vshrl.u32 %v607, 7
        %v609 = vsub.s32 %v606, %v608
        %v610 = vrot.slane %v603, %v609
        %v611 = vcombine.low %v583, %v590
        %v613 = vunpack.c.l.s4 1983009808
        %v614 = vunpack.c.0.s8 %v613
        %v615 = vlaneseq
        %v616 = vshrl.u32 %v615, 7
        %v617 = vsub.s32 %v614, %v616
        %v618 = vrot.slane %v611, %v617
        %v619 = vcombine.low %v593, %v594
        %v621 = vunpack.c.l.s4 1983009808
        %v622 = vunpack.c.0.s8 %v621
        %v623 = vlaneseq
        %v624 = vshrl.u32 %v623, 7
        %v625 = vsub.s32 %v622, %v624
        %v626 = vrot.slane %v619, %v625
        %v627 = vcombine.low %v602, %v610
        %v628 = vcombine.high %v602, %v610
        %v630 = vunpack.c.l.s4 1934713408
        %v631 = vunpack.c.0.s8 %v630
        %v632 = vlaneseq
        %v633 = vshrl.u32 %v632, 7
        %v634 = vsub.s32 %v631, %v633
        %v635 = vrot.slane %v627, %v634
        %v637 = vunpack.c.l.s4 1934713408
        %v638 = vunpack.c.0.s8 %v637
        %v639 = vlaneseq
        %v640 = vshrl.u32 %v639, 7
        %v641 = vsub.s32 %v638, %v640
        %v642 = vrot.slane %v628, %v641
        %v643 = vcombine.low %v618, %v626
        %v644 = vcombine.high %v618, %v626
        %v646 = vunpack.c.l.s4 1934713408
        %v647 = vunpack.c.0.s8 %v646
        %v648 = vlaneseq
        %v649 = vshrl.u32 %v648, 7
        %v650 = vsub.s32 %v647, %v649
        %v651 = vrot.slane %v643, %v650
        %v653 = vunpack.c.l.s4 1934713408
        %v654 = vunpack.c.0.s8 %v653
        %v655 = vlaneseq
        %v656 = vshrl.u32 %v655, 7
        %v657 = vsub.s32 %v654, %v656
        %v658 = vrot.slane %v644, %v657
        %v659 = vcombine.low %v635, %v651
        %v660 = vcombine.high %v635, %v651
        %v661 = vcombine.low %v642, %v658
        %v662 = vcombine.high %v642, %v658
        %vm663 = vcmask 64512
        %664 = vst.msk [vmem:[%s416] sm:$0xff] %vm663, %v659
        %665 = vst.msk [vmem:[%s416 + $0x8] sm:$0xff] %vm663, %v660
        %666 = vst.msk [vmem:[%s416 + $0x10] sm:$0xff] %vm663, %v661
        %667 = vst.msk [vmem:[%s416 + $0x18] sm:$0xff] %vm663, %v662
        %v668 = vld [vmem:[#allocation7] sm:$0xff]
        %v669 = vld [vmem:[#allocation7 + $0x8] sm:$0xff]
        %v670 = vld [vmem:[#allocation7 + $0x10] sm:$0xff]
        %v671 = vld [vmem:[#allocation7 + $0x18] sm:$0xff]
        %v672 = vld [vmem:[%s5] sm:$0x1]
        %v674 = vlaneseq
        %v675 = vshrl.u32 %v674, 7
        %v676 = vsub.s32 0, %v675
        %v677 = vrot.slane %v672, %v676
        %679 = vmatprep.subr.mxu0 0.0
        %680 = vmatpush1.msra.mxu0 0.0
        %681 = vmatprep.subr.mxu0 0.0
        %682 = vmatpush1.msra.mxu0 0.0
        %683 = vmatprep.subr.mxu0 0.0
        %684 = vmatpush1.msra.mxu0 0.0
        %685 = vmatprep.subr.mxu0 0.0
        %686 = vmatpush1.msra.mxu0 0.0
        %687 = vmatprep.subr.mxu0 0.0
        %688 = vmatpush1.msra.mxu0 0.0
        %689 = vmatprep.subr.mxu0 0.0
        %690 = vmatpush1.msra.mxu0 0.0
        %691 = vmatprep.subr.mxu0 0.0
        %692 = vmatpush1.msra.mxu0 0.0
        %693 = vmatprep.subr.mxu0 0.0
        %694 = vmatpush1.msra.mxu0 0.0
        %695 = vmatprep.subr.mxu0 0.0
        %696 = vmatpush1.msra.mxu0 0.0
        %697 = vmatprep.subr.mxu0 0.0
        %698 = vmatpush1.msra.mxu0 0.0
        %699 = vmatprep.subr.mxu0 0.0
        %700 = vmatpush1.msra.mxu0 0.0
        %701 = vmatprep.subr.mxu0 0.0
        %702 = vmatpush1.msra.mxu0 0.0
        %703 = vmatprep.subr.mxu0 0.0
        %704 = vmatpush1.msra.mxu0 %v671
        %705 = vmatprep.subr.mxu0 0.0
        %706 = vmatpush1.msra.mxu0 %v670
        %707 = vmatprep.subr.mxu0 0.0
        %708 = vmatpush1.msra.mxu0 %v669
        %709 = vmatprep.subr.mxu0 0.0
        %710 = vmatpush1.msra.mxu0 %v668
        %711 = vmatprep.subr.mxu0 0.0
        %712 = vmatpush2.msra.mxu0 0.0
        %713 = vmatprep.subr.mxu0 0.0
        %714 = vmatpush2.msra.mxu0 0.0
        %715 = vmatprep.subr.mxu0 0.0
        %716 = vmatpush2.msra.mxu0 0.0
        %717 = vmatprep.subr.mxu0 0.0
        %718 = vmatpush2.msra.mxu0 0.0
        %719 = vmatprep.subr.mxu0 0.0
        %720 = vmatpush2.msra.mxu0 0.0
        %721 = vmatprep.subr.mxu0 0.0
        %722 = vmatpush2.msra.mxu0 0.0
        %723 = vmatprep.subr.mxu0 0.0
        %724 = vmatpush2.msra.mxu0 0.0
        %725 = vmatprep.subr.mxu0 0.0
        %726 = vmatpush2.msra.mxu0 0.0
        %727 = vmatprep.subr.mxu0 0.0
        %728 = vmatpush2.msra.mxu0 0.0
        %729 = vmatprep.subr.mxu0 0.0
        %730 = vmatpush2.msra.mxu0 0.0
        %731 = vmatprep.subr.mxu0 0.0
        %732 = vmatpush2.msra.mxu0 0.0
        %733 = vmatprep.subr.mxu0 0.0
        %734 = vmatpush2.msra.mxu0 0.0
        %735 = vmatprep.subr.mxu0 0.0
        %736 = vmatpush2.msra.mxu0 0.0
        %737 = vmatprep.subr.mxu0 0.0
        %738 = vmatpush2.msra.mxu0 0.0
        %739 = vmatprep.subr.mxu0 0.0
        %740 = vmatpush2.msra.mxu0 0.0
        %741 = vmatprep.subr.mxu0 0.0
        %742 = vmatpush2.msra.mxu0 0.0
        %743 = vmatprep.mubr.f32.mxu0 0.0
        %744 = vmatmul.mubr.f32.gmra.mxu0 %v445
        %v745 = vpop.f32.mrf.mxu0
        %v746 = vadd.f32 %v677, %v745
        %v747 = vpop.f32.mrf.mxu0
        %748 = vdwg.mxu0
        %750 = vrot.lane.b32.xlu0 %v746, 120
        %v751 = vpop.permute.xlu0 %750
        %753 = vrot.lane.b32.xlu0 %v746, 112
        %v754 = vpop.permute.xlu0 %753
        %756 = vrot.lane.b32.xlu0 %v746, 104
        %v757 = vpop.permute.xlu0 %756
        %v759 = vcombine.low %v746, %v754
        %v760 = vcombine.high %v746, %v754
        %v762 = vunpack.c.l.s4 1983009808
        %v763 = vunpack.c.0.s8 %v762
        %v764 = vlaneseq
        %v765 = vshrl.u32 %v764, 7
        %v766 = vsub.s32 %v763, %v765
        %v767 = vrot.slane %v759, %v766
        %v769 = vunpack.c.l.s4 1983009808
        %v770 = vunpack.c.0.s8 %v769
        %v771 = vlaneseq
        %v772 = vshrl.u32 %v771, 7
        %v773 = vsub.s32 %v770, %v772
        %v774 = vrot.slane %v760, %v773
        %v775 = vcombine.low %v751, %v757
        %v776 = vcombine.high %v751, %v757
        %v778 = vunpack.c.l.s4 1983009808
        %v779 = vunpack.c.0.s8 %v778
        %v780 = vlaneseq
        %v781 = vshrl.u32 %v780, 7
        %v782 = vsub.s32 %v779, %v781
        %v783 = vrot.slane %v775, %v782
        %v785 = vunpack.c.l.s4 1983009808
        %v786 = vunpack.c.0.s8 %v785
        %v787 = vlaneseq
        %v788 = vshrl.u32 %v787, 7
        %v789 = vsub.s32 %v786, %v788
        %v790 = vrot.slane %v776, %v789
        %v791 = vcombine.low %v767, %v783
        %v792 = vcombine.high %v767, %v783
        %v794 = vunpack.c.l.s4 1934713408
        %v795 = vunpack.c.0.s8 %v794
        %v796 = vlaneseq
        %v797 = vshrl.u32 %v796, 7
        %v798 = vsub.s32 %v795, %v797
        %v799 = vrot.slane %v791, %v798
        %v801 = vunpack.c.l.s4 1934713408
        %v802 = vunpack.c.0.s8 %v801
        %v803 = vlaneseq
        %v804 = vshrl.u32 %v803, 7
        %v805 = vsub.s32 %v802, %v804
        %v806 = vrot.slane %v792, %v805
        %v807 = vcombine.low %v774, %v790
        %v808 = vcombine.high %v774, %v790
        %v810 = vunpack.c.l.s4 1934713408
        %v811 = vunpack.c.0.s8 %v810
        %v812 = vlaneseq
        %v813 = vshrl.u32 %v812, 7
        %v814 = vsub.s32 %v811, %v813
        %v815 = vrot.slane %v807, %v814
        %v817 = vunpack.c.l.s4 1934713408
        %v818 = vunpack.c.0.s8 %v817
        %v819 = vlaneseq
        %v820 = vshrl.u32 %v819, 7
        %v821 = vsub.s32 %v818, %v820
        %v822 = vrot.slane %v808, %v821
        %v823 = vcombine.high %v799, 0.0
        %v824 = vcombine.high %v806, 0.0
        %v825 = vcombine.high %v815, 0.0
        %v826 = vcombine.high %v822, 0.0
        %v827 = vcombine.low %v799, %v806
        %v829 = vunpack.c.l.s4 1983009808
        %v830 = vunpack.c.0.s8 %v829
        %v831 = vlaneseq
        %v832 = vshrl.u32 %v831, 7
        %v833 = vsub.s32 %v830, %v832
        %v834 = vrot.slane %v827, %v833
        %v835 = vcombine.low %v823, %v824
        %v837 = vunpack.c.l.s4 1983009808
        %v838 = vunpack.c.0.s8 %v837
        %v839 = vlaneseq
        %v840 = vshrl.u32 %v839, 7
        %v841 = vsub.s32 %v838, %v840
        %v842 = vrot.slane %v835, %v841
        %v843 = vcombine.low %v815, %v822
        %v845 = vunpack.c.l.s4 1983009808
        %v846 = vunpack.c.0.s8 %v845
        %v847 = vlaneseq
        %v848 = vshrl.u32 %v847, 7
        %v849 = vsub.s32 %v846, %v848
        %v850 = vrot.slane %v843, %v849
        %v851 = vcombine.low %v825, %v826
        %v853 = vunpack.c.l.s4 1983009808
        %v854 = vunpack.c.0.s8 %v853
        %v855 = vlaneseq
        %v856 = vshrl.u32 %v855, 7
        %v857 = vsub.s32 %v854, %v856
        %v858 = vrot.slane %v851, %v857
        %v859 = vcombine.low %v834, %v842
        %v860 = vcombine.high %v834, %v842
        %v862 = vunpack.c.l.s4 1934713408
        %v863 = vunpack.c.0.s8 %v862
        %v864 = vlaneseq
        %v865 = vshrl.u32 %v864, 7
        %v866 = vsub.s32 %v863, %v865
        %v867 = vrot.slane %v859, %v866
        %v869 = vunpack.c.l.s4 1934713408
        %v870 = vunpack.c.0.s8 %v869
        %v871 = vlaneseq
        %v872 = vshrl.u32 %v871, 7
        %v873 = vsub.s32 %v870, %v872
        %v874 = vrot.slane %v860, %v873
        %v875 = vcombine.low %v850, %v858
        %v876 = vcombine.high %v850, %v858
        %v878 = vunpack.c.l.s4 1934713408
        %v879 = vunpack.c.0.s8 %v878
        %v880 = vlaneseq
        %v881 = vshrl.u32 %v880, 7
        %v882 = vsub.s32 %v879, %v881
        %v883 = vrot.slane %v875, %v882
        %v885 = vunpack.c.l.s4 1934713408
        %v886 = vunpack.c.0.s8 %v885
        %v887 = vlaneseq
        %v888 = vshrl.u32 %v887, 7
        %v889 = vsub.s32 %v886, %v888
        %v890 = vrot.slane %v876, %v889
        %v891 = vcombine.low %v867, %v883
        %v892 = vcombine.high %v867, %v883
        %v893 = vcombine.low %v874, %v890
        %v894 = vcombine.high %v874, %v890
        %895 = vst.msk [vmem:[%s423] sm:$0xff] %vm663, %v891
        %896 = vst.msk [vmem:[%s423 + $0x8] sm:$0xff] %vm663, %v892
        %897 = vst.msk [vmem:[%s423 + $0x10] sm:$0xff] %vm663, %v893
        %898 = vst.msk [vmem:[%s423 + $0x18] sm:$0xff] %vm663, %v894
        %v899 = vld [vmem:[#allocation8] sm:$0xff]
        %v900 = vld [vmem:[#allocation8 + $0x8] sm:$0xff]
        %v901 = vld [vmem:[#allocation8 + $0x10] sm:$0xff]
        %v902 = vld [vmem:[#allocation8 + $0x18] sm:$0xff]
        %v903 = vld [vmem:[%s6] sm:$0x1]
        %v905 = vlaneseq
        %v906 = vshrl.u32 %v905, 7
        %v907 = vsub.s32 0, %v906
        %v908 = vrot.slane %v903, %v907
        %910 = vmatprep.subr.mxu0 0.0
        %911 = vmatpush1.msra.mxu0 0.0
        %912 = vmatprep.subr.mxu0 0.0
        %913 = vmatpush1.msra.mxu0 0.0
        %914 = vmatprep.subr.mxu0 0.0
        %915 = vmatpush1.msra.mxu0 0.0
        %916 = vmatprep.subr.mxu0 0.0
        %917 = vmatpush1.msra.mxu0 0.0
        %918 = vmatprep.subr.mxu0 0.0
        %919 = vmatpush1.msra.mxu0 0.0
        %920 = vmatprep.subr.mxu0 0.0
        %921 = vmatpush1.msra.mxu0 0.0
        %922 = vmatprep.subr.mxu0 0.0
        %923 = vmatpush1.msra.mxu0 0.0
        %924 = vmatprep.subr.mxu0 0.0
        %925 = vmatpush1.msra.mxu0 0.0
        %926 = vmatprep.subr.mxu0 0.0
        %927 = vmatpush1.msra.mxu0 0.0
        %928 = vmatprep.subr.mxu0 0.0
        %929 = vmatpush1.msra.mxu0 0.0
        %930 = vmatprep.subr.mxu0 0.0
        %931 = vmatpush1.msra.mxu0 0.0
        %932 = vmatprep.subr.mxu0 0.0
        %933 = vmatpush1.msra.mxu0 0.0
        %934 = vmatprep.subr.mxu0 0.0
        %935 = vmatpush1.msra.mxu0 %v902
        %936 = vmatprep.subr.mxu0 0.0
        %937 = vmatpush1.msra.mxu0 %v901
        %938 = vmatprep.subr.mxu0 0.0
        %939 = vmatpush1.msra.mxu0 %v900
        %940 = vmatprep.subr.mxu0 0.0
        %941 = vmatpush1.msra.mxu0 %v899
        %942 = vmatprep.subr.mxu0 0.0
        %943 = vmatpush2.msra.mxu0 0.0
        %944 = vmatprep.subr.mxu0 0.0
        %945 = vmatpush2.msra.mxu0 0.0
        %946 = vmatprep.subr.mxu0 0.0
        %947 = vmatpush2.msra.mxu0 0.0
        %948 = vmatprep.subr.mxu0 0.0
        %949 = vmatpush2.msra.mxu0 0.0
        %950 = vmatprep.subr.mxu0 0.0
        %951 = vmatpush2.msra.mxu0 0.0
        %952 = vmatprep.subr.mxu0 0.0
        %953 = vmatpush2.msra.mxu0 0.0
        %954 = vmatprep.subr.mxu0 0.0
        %955 = vmatpush2.msra.mxu0 0.0
        %956 = vmatprep.subr.mxu0 0.0
        %957 = vmatpush2.msra.mxu0 0.0
        %958 = vmatprep.subr.mxu0 0.0
        %959 = vmatpush2.msra.mxu0 0.0
        %960 = vmatprep.subr.mxu0 0.0
        %961 = vmatpush2.msra.mxu0 0.0
        %962 = vmatprep.subr.mxu0 0.0
        %963 = vmatpush2.msra.mxu0 0.0
        %964 = vmatprep.subr.mxu0 0.0
        %965 = vmatpush2.msra.mxu0 0.0
        %966 = vmatprep.subr.mxu0 0.0
        %967 = vmatpush2.msra.mxu0 0.0
        %968 = vmatprep.subr.mxu0 0.0
        %969 = vmatpush2.msra.mxu0 0.0
        %970 = vmatprep.subr.mxu0 0.0
        %971 = vmatpush2.msra.mxu0 0.0
        %972 = vmatprep.subr.mxu0 0.0
        %973 = vmatpush2.msra.mxu0 0.0
        %974 = vmatprep.mubr.f32.mxu0 0.0
        %975 = vmatmul.mubr.f32.gmra.mxu0 %v445
        %v976 = vpop.f32.mrf.mxu0
        %v977 = vadd.f32 %v908, %v976
        %v978 = vpop.f32.mrf.mxu0
        %979 = vdwg.mxu0
        %981 = vrot.lane.b32.xlu0 %v977, 120
        %v982 = vpop.permute.xlu0 %981
        %984 = vrot.lane.b32.xlu0 %v977, 112
        %v985 = vpop.permute.xlu0 %984
        %987 = vrot.lane.b32.xlu0 %v977, 104
        %v988 = vpop.permute.xlu0 %987
        %v990 = vcombine.low %v977, %v985
        %v991 = vcombine.high %v977, %v985
        %v993 = vunpack.c.l.s4 1983009808
        %v994 = vunpack.c.0.s8 %v993
        %v995 = vlaneseq
        %v996 = vshrl.u32 %v995, 7
        %v997 = vsub.s32 %v994, %v996
        %v998 = vrot.slane %v990, %v997
        %v1000 = vunpack.c.l.s4 1983009808
        %v1001 = vunpack.c.0.s8 %v1000
        %v1002 = vlaneseq
        %v1003 = vshrl.u32 %v1002, 7
        %v1004 = vsub.s32 %v1001, %v1003
        %v1005 = vrot.slane %v991, %v1004
        %v1006 = vcombine.low %v982, %v988
        %v1007 = vcombine.high %v982, %v988
        %v1009 = vunpack.c.l.s4 1983009808
        %v1010 = vunpack.c.0.s8 %v1009
        %v1011 = vlaneseq
        %v1012 = vshrl.u32 %v1011, 7
        %v1013 = vsub.s32 %v1010, %v1012
        %v1014 = vrot.slane %v1006, %v1013
        %v1016 = vunpack.c.l.s4 1983009808
        %v1017 = vunpack.c.0.s8 %v1016
        %v1018 = vlaneseq
        %v1019 = vshrl.u32 %v1018, 7
        %v1020 = vsub.s32 %v1017, %v1019
        %v1021 = vrot.slane %v1007, %v1020
        %v1022 = vcombine.low %v998, %v1014
        %v1023 = vcombine.high %v998, %v1014
        %v1025 = vunpack.c.l.s4 1934713408
        %v1026 = vunpack.c.0.s8 %v1025
        %v1027 = vlaneseq
        %v1028 = vshrl.u32 %v1027, 7
        %v1029 = vsub.s32 %v1026, %v1028
        %v1030 = vrot.slane %v1022, %v1029
        %v1032 = vunpack.c.l.s4 1934713408
        %v1033 = vunpack.c.0.s8 %v1032
        %v1034 = vlaneseq
        %v1035 = vshrl.u32 %v1034, 7
        %v1036 = vsub.s32 %v1033, %v1035
        %v1037 = vrot.slane %v1023, %v1036
        %v1038 = vcombine.low %v1005, %v1021
        %v1039 = vcombine.high %v1005, %v1021
        %v1041 = vunpack.c.l.s4 1934713408
        %v1042 = vunpack.c.0.s8 %v1041
        %v1043 = vlaneseq
        %v1044 = vshrl.u32 %v1043, 7
        %v1045 = vsub.s32 %v1042, %v1044
        %v1046 = vrot.slane %v1038, %v1045
        %v1048 = vunpack.c.l.s4 1934713408
        %v1049 = vunpack.c.0.s8 %v1048
        %v1050 = vlaneseq
        %v1051 = vshrl.u32 %v1050, 7
        %v1052 = vsub.s32 %v1049, %v1051
        %v1053 = vrot.slane %v1039, %v1052
        %v1054 = vcombine.high %v1030, 0.0
        %v1055 = vcombine.high %v1037, 0.0
        %v1056 = vcombine.high %v1046, 0.0
        %v1057 = vcombine.high %v1053, 0.0
        %v1058 = vcombine.low %v1030, %v1037
        %v1060 = vunpack.c.l.s4 1983009808
        %v1061 = vunpack.c.0.s8 %v1060
        %v1062 = vlaneseq
        %v1063 = vshrl.u32 %v1062, 7
        %v1064 = vsub.s32 %v1061, %v1063
        %v1065 = vrot.slane %v1058, %v1064
        %v1066 = vcombine.low %v1054, %v1055
        %v1068 = vunpack.c.l.s4 1983009808
        %v1069 = vunpack.c.0.s8 %v1068
        %v1070 = vlaneseq
        %v1071 = vshrl.u32 %v1070, 7
        %v1072 = vsub.s32 %v1069, %v1071
        %v1073 = vrot.slane %v1066, %v1072
        %v1074 = vcombine.low %v1046, %v1053
        %v1076 = vunpack.c.l.s4 1983009808
        %v1077 = vunpack.c.0.s8 %v1076
        %v1078 = vlaneseq
        %v1079 = vshrl.u32 %v1078, 7
        %v1080 = vsub.s32 %v1077, %v1079
        %v1081 = vrot.slane %v1074, %v1080
        %v1082 = vcombine.low %v1056, %v1057
        %v1084 = vunpack.c.l.s4 1983009808
        %v1085 = vunpack.c.0.s8 %v1084
        %v1086 = vlaneseq
        %v1087 = vshrl.u32 %v1086, 7
        %v1088 = vsub.s32 %v1085, %v1087
        %v1089 = vrot.slane %v1082, %v1088
        %v1090 = vcombine.low %v1065, %v1073
        %v1091 = vcombine.high %v1065, %v1073
        %v1093 = vunpack.c.l.s4 1934713408
        %v1094 = vunpack.c.0.s8 %v1093
        %v1095 = vlaneseq
        %v1096 = vshrl.u32 %v1095, 7
        %v1097 = vsub.s32 %v1094, %v1096
        %v1098 = vrot.slane %v1090, %v1097
        %v1100 = vunpack.c.l.s4 1934713408
        %v1101 = vunpack.c.0.s8 %v1100
        %v1102 = vlaneseq
        %v1103 = vshrl.u32 %v1102, 7
        %v1104 = vsub.s32 %v1101, %v1103
        %v1105 = vrot.slane %v1091, %v1104
        %v1106 = vcombine.low %v1081, %v1089
        %v1107 = vcombine.high %v1081, %v1089
        %v1109 = vunpack.c.l.s4 1934713408
        %v1110 = vunpack.c.0.s8 %v1109
        %v1111 = vlaneseq
        %v1112 = vshrl.u32 %v1111, 7
        %v1113 = vsub.s32 %v1110, %v1112
        %v1114 = vrot.slane %v1106, %v1113
        %v1116 = vunpack.c.l.s4 1934713408
        %v1117 = vunpack.c.0.s8 %v1116
        %v1118 = vlaneseq
        %v1119 = vshrl.u32 %v1118, 7
        %v1120 = vsub.s32 %v1117, %v1119
        %v1121 = vrot.slane %v1107, %v1120
        %v1122 = vcombine.low %v1098, %v1114
        %v1123 = vcombine.high %v1098, %v1114
        %v1124 = vcombine.low %v1105, %v1121
        %v1125 = vcombine.high %v1105, %v1121
        %1126 = vst.msk [vmem:[%s430] sm:$0xff] %vm663, %v1122
        %1127 = vst.msk [vmem:[%s430 + $0x8] sm:$0xff] %vm663, %v1123
        %1128 = vst.msk [vmem:[%s430 + $0x10] sm:$0xff] %vm663, %v1124
        %1129 = vst.msk [vmem:[%s430 + $0x18] sm:$0xff] %vm663, %v1125
        %s1130 = sand.u32 %s208, 1
        %s1131 = scalar_lea.sflag [#allocation4], %s1130
        %s1132 = sand.u32 %s208, 1
        %s1133 = smul.addr %s1132, 32
        %s1134 = scalar_lea.vmem [#allocation10], %s1133
        %s1135 = sand.u32 %s32, 1
        %s1136 = scalar_lea.sflag [#allocation12], %s1135
        %s1137 = sand.u32 %s236, 1
        %s1138 = smul.addr %s1137, 32
        %s1139 = scalar_lea.vmem [#allocation11], %s1138
        %s1140 = sand.u32 %s32, 1
        %s1141 = scalar_lea.sflag [#allocation12], %s1140
        %s1142 = sand.u32 %s264, 1
        %s1143 = smul.addr %s1142, 32
        %s1144 = scalar_lea.vmem [#allocation13], %s1143
        // Predicated region
        $region65: #{tpu_custom_call.1} parent=47 // pred_check
          %p1145 = pneg %p218
        $region66: #{tpu_custom_call.1} parent=47 // pred_check_branch
          %1147 = sbr.rel (%p1145) target = $region68
        $region67: #{tpu_custom_call.1} parent=47 // pred_region
          %s1149 = ssub.s32 512, 512
          %1150 = vsyncadd %s1131, %s1149
          %s1151 = smul.addr %s36, 4
          %s1152 = sadd.s32 %s37, %s1151
          %s1153 = smul.addr %s1152, 128
          %s1154 = scalar_lea.hbm %s7, %s1153
          %s1155 = sshll.u32 %s1134, 4
          %s1156 = int_to_ptr.vmem [resolvable:$true] %s1155
          %1161 = dma.vmem_to_hbm [thread:$0]  %s1156, 512, %s1154, %s1131, 128, 128, 8
        $region68: #{tpu_custom_call.1} parent=47 // pred_fallthru
          _
        // Predicated region
        $region69: #{tpu_custom_call.1} parent=47 // pred_check
          %p1162 = pneg %p246
        $region70: #{tpu_custom_call.1} parent=47 // pred_check_branch
          %1164 = sbr.rel (%p1162) target = $region72
        $region71: #{tpu_custom_call.1} parent=47 // pred_region
          %s1166 = ssub.s32 512, 512
          %1167 = vsyncadd %s1136, %s1166
          %s1168 = smul.addr %s36, 4
          %s1169 = sadd.s32 %s37, %s1168
          %s1170 = smul.addr %s1169, 128
          %s1171 = scalar_lea.hbm %s8, %s1170
          %s1172 = sshll.u32 %s1139, 4
          %s1173 = int_to_ptr.vmem [resolvable:$true] %s1172
          %1178 = dma.vmem_to_hbm [thread:$0]  %s1173, 512, %s1171, %s1136, 128, 128, 8
        $region72: #{tpu_custom_call.1} parent=47 // pred_fallthru
          _
        // Predicated region
        $region73: #{tpu_custom_call.1} parent=47 // pred_check
          %p1179 = pneg %p274
        $region74: #{tpu_custom_call.1} parent=47 // pred_check_branch
          %1181 = sbr.rel (%p1179) target = $region76
        $region75: #{tpu_custom_call.1} parent=47 // pred_region
          %s1183 = ssub.s32 512, 512
          %1184 = vsyncadd %s1141, %s1183
          %s1185 = smul.addr %s36, 4
          %s1186 = sadd.s32 %s37, %s1185
          %s1187 = smul.addr %s1186, 128
          %s1188 = scalar_lea.hbm %s9, %s1187
          %s1189 = sshll.u32 %s1144, 4
          %s1190 = int_to_ptr.vmem [resolvable:$true] %s1189
          %1195 = dma.vmem_to_hbm [thread:$0]  %s1190, 512, %s1188, %s1141, 128, 128, 8
        $region76: #{tpu_custom_call.1} parent=47 // pred_fallthru
          _
      $region48: #{tpu_custom_call.1} parent=5 // pred_fallthru
        _
      %p1196 = scmp.le.s32.totalorder 2, %s27
      // Predicated region
      $region77: #{tpu_custom_call.1} parent=5 // pred_check
        %p1197 = pneg %p1196
      $region78: #{tpu_custom_call.1} parent=5 // pred_check_branch
        %1199 = sbr.rel (%p1197) target = $region80
      $region79: #{tpu_custom_call.1} parent=5 // pred_region
        %s1200 = ssub.s32 %s27, 2
        // Predicated region
        $region81: #{tpu_custom_call.1} parent=79 // pred_check
          %p1201 = pneg %p224
        $region82: #{tpu_custom_call.1} parent=79 // pred_check_branch
          %1203 = sbr.rel (%p1201) target = $region84
        $region83: #{tpu_custom_call.1} parent=79 // pred_region
          %s1204 = sand.u32 %s209, 1
          %s1205 = scalar_lea.sflag [#allocation4], %s1204
          %s1206 = sand.u32 %s209, 1
          %s1207 = smul.addr %s1206, 32
          %s1208 = scalar_lea.vmem [#allocation10], %s1207
          %1209 = dma.done %s1205, 512
        $region84: #{tpu_custom_call.1} parent=79 // pred_fallthru
          _
        // Predicated region
        $region85: #{tpu_custom_call.1} parent=79 // pred_check
          %p1210 = pneg %p252
        $region86: #{tpu_custom_call.1} parent=79 // pred_check_branch
          %1212 = sbr.rel (%p1210) target = $region88
        $region87: #{tpu_custom_call.1} parent=79 // pred_region
          %s1213 = sand.u32 %s33, 1
          %s1214 = scalar_lea.sflag [#allocation12], %s1213
          %s1215 = sand.u32 %s237, 1
          %s1216 = smul.addr %s1215, 32
          %s1217 = scalar_lea.vmem [#allocation11], %s1216
          %1218 = dma.done %s1214, 512
        $region88: #{tpu_custom_call.1} parent=79 // pred_fallthru
          _
        // Predicated region
        $region89: #{tpu_custom_call.1} parent=79 // pred_check
          %p1219 = pneg %p280
        $region90: #{tpu_custom_call.1} parent=79 // pred_check_branch
          %1221 = sbr.rel (%p1219) target = $region92
        $region91: #{tpu_custom_call.1} parent=79 // pred_region
          %s1222 = sand.u32 %s33, 1
          %s1223 = scalar_lea.sflag [#allocation12], %s1222
          %s1224 = sand.u32 %s265, 1
          %s1225 = smul.addr %s1224, 32
          %s1226 = scalar_lea.vmem [#allocation13], %s1225
          %1227 = dma.done %s1223, 512
        $region92: #{tpu_custom_call.1} parent=79 // pred_fallthru
          _
      $region80: #{tpu_custom_call.1} parent=5 // pred_fallthru
        _
    $region6: #{tpu_custom_call.1} parent=1 // loop_footer
      %s31 = sadd.s32 1, %s27
    $region7: #{tpu_custom_call.1} parent=1 // loop_footer_branch
      %26 = sbr.rel target = $region3
    $region8: #{tpu_custom_call.1} parent=1 // loop_exit
      _
    %1228 = vsyncpa [#allocation3], 1
    %s1229 = scalar_lea.sflag [#allocation3], 1
    %1230 = vsyncpa %s1229, 1
    %1231 = vsyncpa [#allocation6], 1
    %1232 = vsyncpa [#allocation9], 1
    %1233 = vsyncpa [#allocation4], 1
    %s1234 = scalar_lea.sflag [#allocation4], 1
    %1235 = vsyncpa %s1234, 1
    %1236 = vsyncpa [#allocation12], 1
    %s1237 = scalar_lea.sflag [#allocation12], 1
    %1238 = vsyncpa %s1237, 1

</llo_original>
